<compile_context>
chip_gen: v7x
topology: tpu7x:2x2x1
jax: 0.10.0
libtpu: 0.0.40
codegen_flags: <defaults>
</compile_context>

<pallas_src>
import functools

import jax
import jax.numpy as jnp
from jax.experimental import pallas as pl
from jax.experimental.pallas import tpu as pltpu


def _round_up(x, m):
    return ((x + m - 1) // m) * m


def _patch_embed_kernel(x_ref, w_ref, b_ref, o_ref):
    # x_ref: (tile_m, K_pad)   bf16, streamed patch tile
    # w_ref: (K_pad, E_out)    bf16, VMEM-resident flattened conv weight
    # b_ref: (1, E_out)        f32,  VMEM-resident bias
    # o_ref: (tile_m, E_out)   input dtype (f32)
    acc = jnp.dot(x_ref[...], w_ref[...], preferred_element_type=jnp.float32)
    o_ref[...] = (acc + b_ref[...]).astype(o_ref.dtype)


def _choose_tile_m(m, requested, k_pad, e_out):
    # Sublane constraint: tile rows must be a multiple of 8.
    t = _round_up(max(int(requested), 8), 8)
    # Keep >= 2 grid tiles when M allows, so megacore (v7x) shards the
    # "parallel" grid axis across both TensorCores.
    if m > 8:
        t = min(t, _round_up(pl.cdiv(m, 2), 8))
    # Never larger than (rounded-up) M itself.
    t = min(t, _round_up(m, 8))
    # Conservative VMEM budget (fits v7x's 64 MiB and v5e/v6e once the scoped
    # limit is raised): double-buffered bf16 input tile + f32 output tile +
    # double-buffered bf16 weight + bias.
    budget = 40 * 1024 * 1024
    resident = 2 * (k_pad * e_out * 2 + e_out * 4)
    per_row = 2 * (k_pad * 2) + 2 * (e_out * 4)
    avail = max(budget - resident, 1 << 20)
    t = min(t, max(8, (avail // per_row) // 8 * 8))
    return t


@functools.partial(jax.jit, static_argnums=(3, 4))
def patch_embedding(x, weight, bias, patch_size, tile_m=1024):
    """Equivalent of PatchEmbedding.forward.

    x:      (B, C, H, W)   NCHW
    weight: (E, C, P, P)   Conv2d weight (stride = kernel = P)
    bias:   (E,)           Conv2d bias
    returns (out, H_out, W_out) with out of shape (B, H_out*W_out, E)
    """
    B, C, H, W = x.shape
    E = weight.shape[0]
    P = patch_size
    H_out, W_out = H // P, W // P
    N = H_out * W_out
    M = B * N
    K = C * P * P

    # Lane-friendly sizes.  K padding fuses into the im2col copy; E is padded
    # only when not already 128-aligned (lane-dense stores for odd E).
    K_pad = _round_up(K, 128)
    E_out = E if E % 128 == 0 else _round_up(E, 128)

    # --- im2col as ONE fused permutation (single HBM pass over x) ---
    # patches[b, ho, wo, ph, pw, c] = x[b, c, ho*P + ph, wo*P + pw]
    patches = x.reshape(B, C, H_out, P, W_out, P)
    patches = jnp.transpose(patches, (0, 2, 4, 3, 5, 1))      # (B,Ho,Wo,P,P,C)
    patches = patches.reshape(M, K).astype(jnp.bfloat16)
    if K_pad != K:
        patches = jnp.pad(patches, ((0, 0), (0, K_pad - K)))

    # Flatten conv weight (E, C, P, P) -> (K, E) in matching (ph, pw, C) order.
    w_flat = jnp.transpose(weight, (2, 3, 1, 0)).reshape(K, E).astype(jnp.bfloat16)
    w_flat = jnp.pad(w_flat, ((0, K_pad - K), (0, E_out - E)))
    b_vec = jnp.pad(bias.astype(jnp.float32), (0, E_out - E)).reshape(1, E_out)

    tm = _choose_tile_m(M, tile_m, K_pad, E_out)
    n_tiles = pl.cdiv(M, tm)

    out_itemsize = jnp.dtype(x.dtype).itemsize
    cost = pl.CostEstimate(
        flops=2 * M * K * E,
        transcendentals=0,
        bytes_accessed=(M * K_pad * 2          # bf16 patch stream
                        + K_pad * E_out * 2    # bf16 weight (read once)
                        + E_out * 4            # f32 bias
                        + M * E_out * out_itemsize),  # output write
    )

    out_p = pl.pallas_call(
        _patch_embed_kernel,
        out_shape=jax.ShapeDtypeStruct((M, E_out), x.dtype),
        grid_spec=pl.GridSpec(
            grid=(n_tiles,),
            in_specs=[
                pl.BlockSpec((tm, K_pad), lambda i: (i, 0)),     # streamed tiles
                pl.BlockSpec((K_pad, E_out), lambda i: (0, 0)),  # resident weight
                pl.BlockSpec((1, E_out), lambda i: (0, 0)),      # resident bias
            ],
            out_specs=pl.BlockSpec((tm, E_out), lambda i: (i, 0)),
        ),
        compiler_params=pltpu.CompilerParams(
            dimension_semantics=("parallel",),
            vmem_limit_bytes=64 * 1024 * 1024,
        ),
        cost_estimate=cost,
    )(patches, w_flat, b_vec)

    out = out_p if E_out == E else out_p[:, :E]
    out = out.reshape(B, N, E)
    return out, H_out, W_out


def _reference(x, weight, bias, patch_size):
    # Pure-JAX reference using lax conv (NCHW, OIHW), for correctness check.
    y = jax.lax.conv_general_dilated(
        x, weight,
        window_strides=(patch_size, patch_size),
        padding="VALID",
        dimension_numbers=("NCHW", "OIHW", "NCHW"),
    ) + bias.reshape(1, -1, 1, 1)
    B, E, Ho, Wo = y.shape
    return y.reshape(B, E, Ho * Wo).transpose(0, 2, 1), Ho, Wo


if __name__ == "__main__":
    # Small shapes consistent with the module: B=2, C=4, H=W=16, patch=4, embed=32
    B, C, H, W = 2, 4, 16, 16
    patch_size = 4
    embed_dim = 32

    key = jax.random.PRNGKey(0)
    kx, kw, kb = jax.random.split(key, 3)

    x = jax.random.normal(kx, (B, C, H, W), dtype=jnp.float32)
    # Deterministic synthetic Conv2d parameters (shapes per nn.Conv2d(in, E, P, P)).
    weight = jax.random.normal(kw, (embed_dim, C, patch_size, patch_size),
                               dtype=jnp.float32) * 0.05
    bias = jax.random.normal(kb, (embed_dim,), dtype=jnp.float32) * 0.05

    out, H_out, W_out = patch_embedding(x, weight, bias, patch_size)
    out = jax.block_until_ready(out)

    ref, Ho_ref, Wo_ref = _reference(x, weight, bias, patch_size)
    assert out.shape == (B, (H // patch_size) * (W // patch_size), embed_dim)
    assert (H_out, W_out) == (Ho_ref, Wo_ref)
    # bf16 streaming with f32 accumulation -> relaxed tolerance vs f32 conv.
    err = float(jnp.max(jnp.abs(out - ref)))
    assert jnp.allclose(out, ref, atol=2e-2, rtol=2e-2), err

    print("KERNEL_OK")
</pallas_src>

<mosaic_0001>
module attributes {stable_mosaic.version = 11 : i64} {
  func.func @_patch_embed_kernel(%arg0: i32, %arg1: memref<16x128xbf16, #tpu.memory_space<vmem>>, %arg2: memref<128x128xbf16, #tpu.memory_space<vmem>>, %arg3: memref<1x128xf32, #tpu.memory_space<vmem>>, %arg4: memref<16x128xf32, #tpu.memory_space<vmem>>) attributes {dimension_semantics = [#tpu.dimension_semantics<parallel>], iteration_bounds = array<i64: 2>, scalar_prefetch = 0 : i64, scratch_operands = 0 : i64, tpu.core_type = #tpu.core_type<tc>, window_params = [{transform_indices = @transform_0, window_bounds = array<i64: 16, 128>}, {pipeline_mode = #tpu.pipeline_mode<synchronous>, transform_indices = @transform_1, window_bounds = array<i64: 128, 128>}, {pipeline_mode = #tpu.pipeline_mode<synchronous>, transform_indices = @transform_2, window_bounds = array<i64: 1, 128>}, {transform_indices = @transform_3, window_bounds = array<i64: 16, 128>}]} {
    %c0 = arith.constant 0 : index
    %c0_0 = arith.constant 0 : index
    %0 = vector.load %arg1[%c0, %c0_0] : memref<16x128xbf16, #tpu.memory_space<vmem>>, vector<16x128xbf16>
    %c0_1 = arith.constant 0 : index
    %c0_2 = arith.constant 0 : index
    %1 = vector.load %arg2[%c0_1, %c0_2] : memref<128x128xbf16, #tpu.memory_space<vmem>>, vector<128x128xbf16>
    %cst = arith.constant dense<0.000000e+00> : vector<16x128xf32>
    %2 = tpu.matmul %0, %1, %cst {dimension_numbers = #tpu.dot_dimension_numbers<[1], [0], [0], [1], [0, 0, 1, 1], [], []>} : vector<16x128xbf16>, vector<128x128xbf16>, vector<16x128xf32> -> vector<16x128xf32>
    %c0_3 = arith.constant 0 : index
    %c0_4 = arith.constant 0 : index
    %3 = vector.load %arg3[%c0_3, %c0_4] : memref<1x128xf32, #tpu.memory_space<vmem>>, vector<1x128xf32>
    %4 = vector.broadcast %3 : vector<1x128xf32> to vector<16x128xf32>
    %5 = arith.addf %2, %4 : vector<16x128xf32>
    %c0_5 = arith.constant 0 : index
    %c0_6 = arith.constant 0 : index
    %6 = vector.load %arg4[%c0_5, %c0_6] : memref<16x128xf32, #tpu.memory_space<vmem>>, vector<16x128xf32>
    tpu.vector_store %arg4[%c0_5, %c0_6], %5 {strides = array<i32>} : memref<16x128xf32, #tpu.memory_space<vmem>>, vector<16x128xf32>,
    return
  }
  func.func @transform_0(%arg0: i32) -> (i32, i32) {
    %c0_i32 = arith.constant 0 : i32
    %c0_i32_0 = arith.constant 0 : i32
    return %arg0, %c0_i32 : i32, i32
  }
  func.func @transform_1(%arg0: i32) -> (i32, i32) {
    %c0_i32 = arith.constant 0 : i32
    %c0_i32_0 = arith.constant 0 : i32
    %c0_i32_1 = arith.constant 0 : i32
    return %c0_i32, %c0_i32_0 : i32, i32
  }
  func.func @transform_2(%arg0: i32) -> (i32, i32) {
    %c0_i32 = arith.constant 0 : i32
    %c0_i32_0 = arith.constant 0 : i32
    %c0_i32_1 = arith.constant 0 : i32
    return %c0_i32, %c0_i32_0 : i32, i32
  }
  func.func @transform_3(%arg0: i32) -> (i32, i32) {
    %c0_i32 = arith.constant 0 : i32
    %c0_i32_0 = arith.constant 0 : i32
    return %arg0, %c0_i32 : i32, i32
  }
}

</mosaic_0001>

<llo_original>
// kernel: patch_embedding.1
$region0: #{patch_embedding.1}
  #allocation0 [shape = 'u32[]', space=smem, size = 0x4, offset = 0x4, fixed_abs, tag = 'smem constant byte address 0x4 - core index']
  #allocation1 [shape = 'u32[144,128]{1,0:T(1,128)}', space=vmem, size = 0x12000, scoped, tag = 'internal scratch']
  %s0 = inlined_call_operand.hbm [shape: bf16[32,128], index: 0, kind: input, shape index: {}]
  %s1 = inlined_call_operand.hbm [shape: bf16[128,128], index: 1, kind: input, shape index: {}]
  %s2 = inlined_call_operand.hbm [shape: f32[1,128], index: 2, kind: input, shape index: {}]
  %s3 = inlined_call_operand.hbm [shape: f32[32,128], index: 3, kind: output, shape index: {}]
  %s4 = sld [smem:[#allocation0]]
  $region57: #{patch_embedding.1} parent=0
    _
  %s6 = ssub.s32 1, %s4
  %s7 = scalar_select 0, %s6, %s4
  $region1: #{patch_embedding.1} parent=0
    #allocation2 [shape = 'u8[8192]{0}', space=vmem, size = 0x2000, scoped, tag = 'input window, operand 0']
    #allocation3 [shape = 's32[2]{0}', space=sflag, size = 0x8, scoped, tag = 'scoped memory for patch_embedding.1']
    #allocation4 [shape = 's32[2]{0}', space=sflag, size = 0x8, scoped, tag = 'scoped memory for patch_embedding.1']
    #allocation5 [shape = 'u8[32768]{0}', space=vmem, size = 0x8000, scoped, tag = 'input window, operand 1, single buffered']
    #allocation6 [shape = 's32[1]{0}', space=sflag, size = 0x4, scoped, tag = 'scoped memory for patch_embedding.1']
    #allocation7 [shape = 'u8[512]{0}', space=vmem, size = 0x400, scoped, tag = 'input window, operand 2, single buffered']
    #allocation8 [shape = 'u8[16384]{0}', space=vmem, size = 0x4000, scoped, tag = 'output window, operand 0']
    %8 = vsyncpa [#allocation3], 0
    %s9 = scalar_lea.sflag [#allocation3], 1
    %10 = vsyncpa %s9, 0
    %11 = vsyncpa [#allocation6], 0
    %12 = vsyncpa [#allocation4], 0
    %s13 = scalar_lea.sflag [#allocation4], 1
    %14 = vsyncpa %s13, 0
    loop: start=0, step=1, limit=4
    $region2: #{patch_embedding.1} parent=1 // loop_pre_header
      _
    $region3: #{patch_embedding.1} parent=1 // loop_header
      %s16 = sphi 0, %s20
      %p17 = scmp.ge.s32.totalorder %s16, 4
      %s26 = sphi 0, %s28
      %s29 = sphi 0, %s26
      %s30 = sphi 0, %s29
      %s46 = sphi 0, %s30
      %s50 = sphi 0, %s50
      %s52 = sphi 0, %s50
      %s53 = sphi 0, %s52
      %s67 = sphi 0, %s53
      %s71 = sphi 0, %s71
      %s73 = sphi 0, %s71
      %s74 = sphi 0, %s73
      %s88 = sphi 0, %s74
      %s94 = sphi 0, %s96
      %s97 = sphi 0, %s94
      %s98 = sphi 0, %s97
      %s114 = sphi 0, %s98
    $region4: #{patch_embedding.1} parent=1 // loop_header_branch
      %19 = sbr.rel (%p17) target = $region8
    $region5: #{patch_embedding.1} parent=1 // loop_body
      %s21 = ssub.s32 %s16, 1
      %s22 = ssub.s32 %s16, 2
      %s23 = sadd.s32 %s16, 1
      %s24 = ssub.s32 %s16, %s23
      %p25 = scmp.eq.s32.totalorder %s24, 0
      %s27 = sadd.s32 %s26, 1
      %s28 = scalar_select %p25, %s26, %s27
      %p31 = pneg %p25
      %p32 = scmp.eq.s32.totalorder %s16, 1
      %p33 = por %p31, %p32
      %p34 = scmp.ne.s32.totalorder %s26, %s29
      %p35 = scmp.eq.s32.totalorder %s16, 0
      %p36 = por %p34, %p35
      %p37 = scmp.ne.s32.totalorder %s26, %s29
      %p38 = scmp.eq.s32.totalorder %s21, 1
      %p39 = por %p37, %p38
      %p40 = scmp.ne.s32.totalorder %s29, %s30
      %p41 = scmp.eq.s32.totalorder %s21, 0
      %p42 = por %p40, %p41
      %p43 = scmp.ne.s32.totalorder %s29, %s30
      %p44 = scmp.eq.s32.totalorder %s22, 1
      %p45 = por %p43, %p44
      %p47 = scmp.ne.s32.totalorder %s30, %s46
      %p48 = scmp.eq.s32.totalorder %s22, 0
      %p49 = por %p47, %p48
      %s51 = sadd.s32 %s50, 1
      %p54 = scmp.eq.s32.totalorder %s16, 1
      %p55 = scmp.ne.s32.totalorder %s50, %s52
      %p56 = scmp.eq.s32.totalorder %s16, 0
      %p57 = por %p55, %p56
      %p58 = scmp.ne.s32.totalorder %s50, %s52
      %p59 = scmp.eq.s32.totalorder %s21, 1
      %p60 = por %p58, %p59
      %p61 = scmp.ne.s32.totalorder %s52, %s53
      %p62 = scmp.eq.s32.totalorder %s21, 0
      %p63 = por %p61, %p62
      %p64 = scmp.ne.s32.totalorder %s52, %s53
      %p65 = scmp.eq.s32.totalorder %s22, 1
      %p66 = por %p64, %p65
      %p68 = scmp.ne.s32.totalorder %s53, %s67
      %p69 = scmp.eq.s32.totalorder %s22, 0
      %p70 = por %p68, %p69
      %s72 = sadd.s32 %s71, 1
      %p75 = scmp.eq.s32.totalorder %s16, 1
      %p76 = scmp.ne.s32.totalorder %s71, %s73
      %p77 = scmp.eq.s32.totalorder %s16, 0
      %p78 = por %p76, %p77
      %p79 = scmp.ne.s32.totalorder %s71, %s73
      %p80 = scmp.eq.s32.totalorder %s21, 1
      %p81 = por %p79, %p80
      %p82 = scmp.ne.s32.totalorder %s73, %s74
      %p83 = scmp.eq.s32.totalorder %s21, 0
      %p84 = por %p82, %p83
      %p85 = scmp.ne.s32.totalorder %s73, %s74
      %p86 = scmp.eq.s32.totalorder %s22, 1
      %p87 = por %p85, %p86
      %p89 = scmp.ne.s32.totalorder %s74, %s88
      %p90 = scmp.eq.s32.totalorder %s22, 0
      %p91 = por %p89, %p90
      %s92 = ssub.s32 %s16, %s23
      %p93 = scmp.eq.s32.totalorder %s92, 0
      %s95 = sadd.s32 %s94, 1
      %s96 = scalar_select %p93, %s94, %s95
      %p99 = pneg %p93
      %p100 = scmp.eq.s32.totalorder %s16, 1
      %p101 = por %p99, %p100
      %p102 = scmp.ne.s32.totalorder %s94, %s97
      %p103 = scmp.eq.s32.totalorder %s16, 0
      %p104 = por %p102, %p103
      %p105 = scmp.ne.s32.totalorder %s94, %s97
      %p106 = scmp.eq.s32.totalorder %s21, 1
      %p107 = por %p105, %p106
      %p108 = scmp.ne.s32.totalorder %s97, %s98
      %p109 = scmp.eq.s32.totalorder %s21, 0
      %p110 = por %p108, %p109
      %p111 = scmp.ne.s32.totalorder %s97, %s98
      %p112 = scmp.eq.s32.totalorder %s22, 1
      %p113 = por %p111, %p112
      %p115 = scmp.ne.s32.totalorder %s98, %s114
      %p116 = scmp.eq.s32.totalorder %s22, 0
      %p117 = por %p115, %p116
      %p118 = scmp.le.s32.totalorder 1, %s16
      %p119 = scmp.lt.s32.totalorder %s16, 3
      %p120 = pnand %p118, %p119
      %p121 = pneg %p120
      // Predicated region
      $region9: #{patch_embedding.1} parent=5 // pred_check
        _
      $region10: #{patch_embedding.1} parent=5 // pred_check_branch
        %123 = sbr.rel (%p120) target = $region12
      $region11: #{patch_embedding.1} parent=5 // pred_region
        %s124 = ssub.s32 %s16, 1
        // Predicated region
        $region13: #{patch_embedding.1} parent=11 // pred_check
          %p125 = pneg %p63
        $region14: #{patch_embedding.1} parent=11 // pred_check_branch
          %127 = sbr.rel (%p125) target = $region16
        $region15: #{patch_embedding.1} parent=11 // pred_region
          %s129 = ssub.s32 1024, 1024
          %130 = vsyncadd [#allocation6], %s129
          %s131 = sshll.u32 [#allocation5], 4
          %s132 = int_to_ptr.vmem [resolvable:$true] %s131
          %137 = dma.hbm_to_vmem [thread:$0]  %s1, 1024, %s132, [#allocation6], 64, 64, 4
        $region16: #{patch_embedding.1} parent=11 // pred_fallthru
          _
        // Predicated region
        $region17: #{patch_embedding.1} parent=11 // pred_check
          %p138 = pneg %p84
        $region18: #{patch_embedding.1} parent=11 // pred_check_branch
          %140 = sbr.rel (%p138) target = $region20
        $region19: #{patch_embedding.1} parent=11 // pred_region
          %s142 = ssub.s32 16, 16
          %143 = vsyncadd [#allocation6], %s142
          %s145 = sshll.u32 [#allocation7], 4
          %s146 = int_to_ptr.vmem [resolvable:$true] %s145
          %148 = dma.hbm_to_vmem [thread:$0]  %s2, 16, %s146, [#allocation6]
        $region20: #{patch_embedding.1} parent=11 // pred_fallthru
          _
      $region12: #{patch_embedding.1} parent=5 // pred_fallthru
        _
      %p149 = scmp.lt.s32.totalorder %s16, 2
      // Predicated region
      $region21: #{patch_embedding.1} parent=5 // pred_check
        %p150 = pneg %p149
      $region22: #{patch_embedding.1} parent=5 // pred_check_branch
        %152 = sbr.rel (%p150) target = $region24
      $region23: #{patch_embedding.1} parent=5 // pred_region
        // Predicated region
        $region25: #{patch_embedding.1} parent=23 // pred_check
          %p153 = pneg %p36
        $region26: #{patch_embedding.1} parent=23 // pred_check_branch
          %155 = sbr.rel (%p153) target = $region28
        $region27: #{patch_embedding.1} parent=23 // pred_region
          %s156 = sand.u32 %s26, 1
          %s157 = scalar_lea.sflag [#allocation3], %s156
          %s158 = sand.u32 %s26, 1
          %s159 = smul.addr %s158, 8
          %s160 = scalar_lea.vmem [#allocation2], %s159
          %s161 = smul.u32 2, %s16
          %s163 = ssub.s32 128, 128
          %164 = vsyncadd %s157, %s163
          %s165 = smul.addr %s161, 64
          %s166 = scalar_lea.hbm %s0, %s165
          %s167 = sshll.u32 %s160, 4
          %s168 = int_to_ptr.vmem [resolvable:$true] %s167
          %173 = dma.hbm_to_vmem [thread:$0]  %s166, 128, %s168, %s157, 64, 64, 4
        $region28: #{patch_embedding.1} parent=23 // pred_fallthru
          _
      $region24: #{patch_embedding.1} parent=5 // pred_fallthru
        _
      %p174 = scmp.le.s32.totalorder 1, %s16
      %p175 = scmp.lt.s32.totalorder %s16, 3
      %p176 = pnand %p174, %p175
      %p177 = pneg %p176
      // Predicated region
      $region29: #{patch_embedding.1} parent=5 // pred_check
        _
      $region30: #{patch_embedding.1} parent=5 // pred_check_branch
        %179 = sbr.rel (%p176) target = $region32
      $region31: #{patch_embedding.1} parent=5 // pred_region
        %s180 = ssub.s32 %s16, 1
        %s181 = sand.u32 %s29, 1
        %s182 = scalar_lea.sflag [#allocation3], %s181
        %s183 = sand.u32 %s29, 1
        %s184 = smul.addr %s183, 8
        %s185 = scalar_lea.vmem [#allocation2], %s184
        // Predicated region
        $region33: #{patch_embedding.1} parent=31 // pred_check
          %p186 = pneg %p42
        $region34: #{patch_embedding.1} parent=31 // pred_check_branch
          %188 = sbr.rel (%p186) target = $region36
        $region35: #{patch_embedding.1} parent=31 // pred_region
          %189 = dma.done %s182, 128
        $region36: #{patch_embedding.1} parent=31 // pred_fallthru
          _
        // Predicated region
        $region37: #{patch_embedding.1} parent=31 // pred_check
          %p190 = pneg %p63
        $region38: #{patch_embedding.1} parent=31 // pred_check_branch
          %192 = sbr.rel (%p190) target = $region40
        $region39: #{patch_embedding.1} parent=31 // pred_region
          %193 = dma.done [#allocation6], 1024
        $region40: #{patch_embedding.1} parent=31 // pred_fallthru
          _
        // Predicated region
        $region41: #{patch_embedding.1} parent=31 // pred_check
          %p194 = pneg %p84
        $region42: #{patch_embedding.1} parent=31 // pred_check_branch
          %196 = sbr.rel (%p194) target = $region44
        $region43: #{patch_embedding.1} parent=31 // pred_region
          %197 = dma.done [#allocation6], 16
        $region44: #{patch_embedding.1} parent=31 // pred_fallthru
          _
        %s198 = sand.u32 %s29, 1
        %s199 = scalar_lea.sflag [#allocation3], %s198
        %s200 = sand.u32 %s29, 1
        %s201 = smul.addr %s200, 8
        %s202 = scalar_lea.vmem [#allocation2], %s201
        %p203 = pneg %p42
        %p204 = pneg %p39
        %p205 = pneg %p63
        %p206 = pneg %p60
        %p207 = pneg %p84
        %p208 = pneg %p81
        %p209 = pneg %p110
        %p210 = pneg %p107
        %s211 = sand.u32 %s97, 1
        %s212 = scalar_lea.sflag [#allocation4], %s211
        %s213 = sand.u32 %s97, 1
        %s214 = smul.addr %s213, 16
        %s215 = scalar_lea.vmem [#allocation8], %s214
        %s216 = smul.u32 2, %s21
        %s217 = smul.u32 2, %s21
        %v219 = vld [vmem:[%s185] sm:$0xf]
        %v220 = vld [vmem:[%s185 + $0x4] sm:$0xf]
        %v221 = vld [vmem:[#allocation5] sm:$0xf]
        %v222 = vld [vmem:[#allocation5 + $0x4] sm:$0xf]
        %v223 = vld [vmem:[#allocation5 + $0x8] sm:$0xf]
        %v224 = vld [vmem:[#allocation5 + $0xc] sm:$0xf]
        %v225 = vld [vmem:[#allocation5 + $0x10] sm:$0xf]
        %v226 = vld [vmem:[#allocation5 + $0x14] sm:$0xf]
        %v227 = vld [vmem:[#allocation5 + $0x18] sm:$0xf]
        %v228 = vld [vmem:[#allocation5 + $0x1c] sm:$0xf]
        %v229 = vld [vmem:[#allocation5 + $0x20] sm:$0xf]
        %v230 = vld [vmem:[#allocation5 + $0x24] sm:$0xf]
        %v231 = vld [vmem:[#allocation5 + $0x28] sm:$0xf]
        %v232 = vld [vmem:[#allocation5 + $0x2c] sm:$0xf]
        %v233 = vld [vmem:[#allocation5 + $0x30] sm:$0xf]
        %v234 = vld [vmem:[#allocation5 + $0x34] sm:$0xf]
        %v235 = vld [vmem:[#allocation5 + $0x38] sm:$0xf]
        %v236 = vld [vmem:[#allocation5 + $0x3c] sm:$0xf]
        %v237 = vld [vmem:[#allocation7] sm:$0x1]
        %v239 = vlaneseq
        %v240 = vshrl.u32 %v239, 7
        %v241 = vsub.s32 0, %v240
        %v242 = vrot.slane %v237, %v241
        %v246 = vunpack.c.l.b16 %v219
        %v247 = vunpack.c.l.b16 %v220
        %v248 = vpack.c.b16 %v247, %v246
        %v266 = vunpack.c.l.b16 %v221
        %v267 = vunpack.c.l.b16 %v222
        %v268 = vunpack.c.l.b16 %v223
        %v269 = vunpack.c.l.b16 %v224
        %v270 = vunpack.c.l.b16 %v225
        %v271 = vunpack.c.l.b16 %v226
        %v272 = vunpack.c.l.b16 %v227
        %v273 = vunpack.c.l.b16 %v228
        %v274 = vunpack.c.l.b16 %v229
        %v275 = vunpack.c.l.b16 %v230
        %v276 = vunpack.c.l.b16 %v231
        %v277 = vunpack.c.l.b16 %v232
        %v278 = vunpack.c.l.b16 %v233
        %v279 = vunpack.c.l.b16 %v234
        %v280 = vunpack.c.l.b16 %v235
        %v281 = vunpack.c.l.b16 %v236
        %v282 = vpack.c.b16 %v267, %v266
        %v283 = vpack.c.b16 %v269, %v268
        %v284 = vpack.c.b16 %v271, %v270
        %v285 = vpack.c.b16 %v273, %v272
        %v286 = vpack.c.b16 %v275, %v274
        %v287 = vpack.c.b16 %v277, %v276
        %v288 = vpack.c.b16 %v279, %v278
        %v289 = vpack.c.b16 %v281, %v280
        %298 = vmatprep.subr.bf16.mxu0 0
        %299 = vmatpush1.bf16.msra.mxu0 %v282
        %300 = vmatprep.subr.bf16.mxu0 0
        %301 = vmatpush1.bf16.msra.mxu0 %v283
        %302 = vmatprep.subr.bf16.mxu0 0
        %303 = vmatpush1.bf16.msra.mxu0 %v284
        %304 = vmatprep.subr.bf16.mxu0 0
        %305 = vmatpush1.bf16.msra.mxu0 %v285
        %306 = vmatprep.subr.bf16.mxu0 0
        %307 = vmatpush1.bf16.msra.mxu0 %v286
        %308 = vmatprep.subr.bf16.mxu0 0
        %309 = vmatpush1.bf16.msra.mxu0 %v287
        %310 = vmatprep.subr.bf16.mxu0 0
        %311 = vmatpush1.bf16.msra.mxu0 %v288
        %312 = vmatprep.subr.bf16.mxu0 0
        %313 = vmatpush1.bf16.msra.mxu0 %v289
        %314 = vmatprep.subr.bf16.mxu0 0
        %315 = vmatpush1.bf16.msra.mxu0 0
        %316 = vmatprep.subr.bf16.mxu0 0
        %317 = vmatpush1.bf16.msra.mxu0 0
        %318 = vmatprep.subr.bf16.mxu0 0
        %319 = vmatpush1.bf16.msra.mxu0 0
        %320 = vmatprep.subr.bf16.mxu0 0
        %321 = vmatpush1.bf16.msra.mxu0 0
        %322 = vmatprep.subr.bf16.mxu0 0
        %323 = vmatpush1.bf16.msra.mxu0 0
        %324 = vmatprep.subr.bf16.mxu0 0
        %325 = vmatpush1.bf16.msra.mxu0 0
        %326 = vmatprep.subr.bf16.mxu0 0
        %327 = vmatpush1.bf16.msra.mxu0 0
        %328 = vmatprep.subr.bf16.mxu0 0
        %329 = vmatpush1.bf16.msra.mxu0 0
        %330 = vmatprep.mubr.bf16.mxu0 0
        %331 = vmatmul.mubr.bf16.gmra.mrb[0].mxu0 %v248
        %v332 = vpop.f32.mrb[0].mxu0
        %v333 = vadd.f32 %v242, %v332
        %v334 = vpop.f32.mrb[0].mxu0
        %v335 = vpop.f32.mrb[0].mxu0
        %v336 = vadd.f32 %v242, %v335
        %v337 = vpop.f32.mrb[0].mxu0
        %338 = vdwg.mxu0
        %339 = vst [vmem:[%s215] sm:$0xff] %v333
        %340 = vst [vmem:[%s215 + $0x8] sm:$0xff] %v336
        %s341 = sand.u32 %s97, 1
        %s342 = scalar_lea.sflag [#allocation4], %s341
        %s343 = sand.u32 %s97, 1
        %s344 = smul.addr %s343, 16
        %s345 = scalar_lea.vmem [#allocation8], %s344
        // Predicated region
        $region45: #{patch_embedding.1} parent=31 // pred_check
          %p346 = pneg %p107
        $region46: #{patch_embedding.1} parent=31 // pred_check_branch
          %348 = sbr.rel (%p346) target = $region48
        $region47: #{patch_embedding.1} parent=31 // pred_region
          %s349 = smul.u32 2, %s21
          %s351 = ssub.s32 256, 256
          %352 = vsyncadd %s342, %s351
          %s353 = smul.addr %s349, 128
          %s354 = scalar_lea.hbm %s3, %s353
          %s355 = sshll.u32 %s345, 4
          %s356 = int_to_ptr.vmem [resolvable:$true] %s355
          %361 = dma.vmem_to_hbm [thread:$0]  %s356, 256, %s354, %s342, 128, 128, 8
        $region48: #{patch_embedding.1} parent=31 // pred_fallthru
          _
      $region32: #{patch_embedding.1} parent=5 // pred_fallthru
        _
      %p362 = scmp.le.s32.totalorder 2, %s16
      // Predicated region
      $region49: #{patch_embedding.1} parent=5 // pred_check
        %p363 = pneg %p362
      $region50: #{patch_embedding.1} parent=5 // pred_check_branch
        %365 = sbr.rel (%p363) target = $region52
      $region51: #{patch_embedding.1} parent=5 // pred_region
        %s366 = ssub.s32 %s16, 2
        // Predicated region
        $region53: #{patch_embedding.1} parent=51 // pred_check
          %p367 = pneg %p113
        $region54: #{patch_embedding.1} parent=51 // pred_check_branch
          %369 = sbr.rel (%p367) target = $region56
        $region55: #{patch_embedding.1} parent=51 // pred_region
          %s370 = sand.u32 %s98, 1
          %s371 = scalar_lea.sflag [#allocation4], %s370
          %s372 = sand.u32 %s98, 1
          %s373 = smul.addr %s372, 16
          %s374 = scalar_lea.vmem [#allocation8], %s373
          %375 = dma.done %s371, 256
        $region56: #{patch_embedding.1} parent=51 // pred_fallthru
          _
      $region52: #{patch_embedding.1} parent=5 // pred_fallthru
        _
    $region6: #{patch_embedding.1} parent=1 // loop_footer
      %s20 = sadd.s32 1, %s16
    $region7: #{patch_embedding.1} parent=1 // loop_footer_branch
      %15 = sbr.rel target = $region3
    $region8: #{patch_embedding.1} parent=1 // loop_exit
      _
    %376 = vsyncpa [#allocation3], 1
    %s377 = scalar_lea.sflag [#allocation3], 1
    %378 = vsyncpa %s377, 1
    %379 = vsyncpa [#allocation6], 1
    %380 = vsyncpa [#allocation4], 1
    %s381 = scalar_lea.sflag [#allocation4], 1
    %382 = vsyncpa %s381, 1

</llo_original>
